<compile_context>
chip_gen: v7x
topology: tpu7x:2x2x1
jax: 0.10.0
libtpu: 0.0.40
codegen_flags: <defaults>
</compile_context>

<pallas_src>
import functools

import jax
import jax.numpy as jnp
from jax.experimental import pallas as pl
from jax.experimental.pallas import tpu as pltpu


def encoder_kernel(
    it_ref,            # [2, TB]   instrument^T tile
    mt_ref,            # [2, TB]   m_obs^T tile
    nt_ref,            # [1, TB]   n_obs^T tile
    w1_ref,            # [128, 8]  layer-1 weight, K padded to 8; col 5 = b1, cols 6-7 = 0
    w2_ref, b2_ref,    # [64, 128], [64, 1]
    w3_ref, b3_ref,    # [32, 64],  [32, 1]
    wh_ref, bh_ref,    # [2, 32],   [2, 1]   fused (mu, logsigma) head
    mu_ref,            # [1, TB]
    sc_ref,            # [1, TB]
    x_scr,             # VMEM scratch [8, TB]
):
    tb = x_scr.shape[1]

    # Assemble the transposed, K-padded, bias-augmented input block in VMEM:
    # rows 0-4 = the 5 input features, row 5 = 1.0 (bias column), rows 6-7 = 0.
    x_scr[0:2, :] = it_ref[...]
    x_scr[2:4, :] = mt_ref[...]
    x_scr[4:5, :] = nt_ref[...]
    x_scr[5:6, :] = jnp.ones((1, tb), jnp.float32)
    x_scr[6:8, :] = jnp.zeros((2, tb), jnp.float32)

    # Feature net (Dropout == identity at inference); batch on the lane axis.
    h = jnp.dot(w1_ref[...], x_scr[...], preferred_element_type=jnp.float32)
    h = jnp.maximum(h, 0.0)                                                   # [128, TB]
    h = jnp.dot(w2_ref[...], h, preferred_element_type=jnp.float32) + b2_ref[...]
    h = jnp.maximum(h, 0.0)                                                   # [64, TB]
    h = jnp.dot(w3_ref[...], h, preferred_element_type=jnp.float32) + b3_ref[...]
    h = jnp.maximum(h, 0.0)                                                   # [32, TB]

    # Fused heads: row 0 -> mu, row 1 -> logsigma.
    head = jnp.dot(wh_ref[...], h, preferred_element_type=jnp.float32) + bh_ref[...]
    mu_ref[...] = head[0:1, :]
    sc_ref[...] = jnp.exp(head[1:2, :]) + 1e-8


@functools.partial(jax.jit, static_argnames=("tile_b",))
def encoder_forward(instrument, m_obs, n_obs, params, *, tile_b=1024):
    """Runs the Encoder forward. Returns (mu, scale) of the output Normal.

    Parameters are in torch nn.Linear layout: W [out, in], b [out].
    """
    assert tile_b % 128 == 0, "tile_b must be a multiple of 128 (lane width)"
    (w1, b1, w2, b2, w3, b3, wmu, bmu, wls, bls) = params

    B = instrument.shape[0]
    n_tiles = pl.cdiv(B, tile_b)
    b_pad = n_tiles * tile_b

    def prep(a):  # [B, k] -> [k, b_pad]: put batch on the lane axis, zero-pad
        a = a.astype(jnp.float32).T
        return jnp.pad(a, ((0, 0), (0, b_pad - B)))

    it, mt, nt = prep(instrument), prep(m_obs), prep(n_obs)

    # Layer-1 weight with K padded 5 -> 8 and the bias folded in as column 5.
    w1_aug = jnp.concatenate(
        [w1, b1[:, None], jnp.zeros((w1.shape[0], 2), jnp.float32)], axis=1)   # [128, 8]
    b2c = b2[:, None]                                                          # [64, 1]
    b3c = b3[:, None]                                                          # [32, 1]
    wh = jnp.concatenate([wmu, wls], axis=0)                                   # [2, 32]
    bh = jnp.concatenate([bmu, bls], axis=0)[:, None]                          # [2, 1]

    def full(arr):  # whole (small) array resident in VMEM, same block every step
        return pl.BlockSpec(arr.shape, lambda i: (0, 0))

    mu_t, sc_t = pl.pallas_call(
        encoder_kernel,
        out_shape=(
            jax.ShapeDtypeStruct((1, b_pad), jnp.float32),
            jax.ShapeDtypeStruct((1, b_pad), jnp.float32),
        ),
        grid_spec=pltpu.PrefetchScalarGridSpec(
            num_scalar_prefetch=0,
            grid=(n_tiles,),
            in_specs=[
                pl.BlockSpec((2, tile_b), lambda i: (0, i)),   # instrument^T
                pl.BlockSpec((2, tile_b), lambda i: (0, i)),   # m_obs^T
                pl.BlockSpec((1, tile_b), lambda i: (0, i)),   # n_obs^T
                full(w1_aug),
                full(w2), full(b2c),
                full(w3), full(b3c),
                full(wh), full(bh),
            ],
            out_specs=[
                pl.BlockSpec((1, tile_b), lambda i: (0, i)),   # mu row
                pl.BlockSpec((1, tile_b), lambda i: (0, i)),   # scale row
            ],
            scratch_shapes=[pltpu.VMEM((8, tile_b), jnp.float32)],
        ),
        compiler_params=pltpu.CompilerParams(
            dimension_semantics=("parallel",)),
    )(it, mt, nt, w1_aug, w2, b2c, w3, b3c, wh, bh)

    mu = mu_t[:, :B].T      # [B, 1]
    scale = sc_t[:, :B].T   # [B, 1]
    return mu, scale


def init_params(key):
    """Deterministic parameter init mimicking torch nn.Linear (W:[out,in], b:[out])."""
    def linear(k, n_in, n_out):
        kw, kb = jax.random.split(k)
        bound = 1.0 / jnp.sqrt(jnp.float32(n_in))
        w = jax.random.uniform(kw, (n_out, n_in), jnp.float32, -bound, bound)
        b = jax.random.uniform(kb, (n_out,), jnp.float32, -bound, bound)
        return w, b

    keys = jax.random.split(key, 5)
    w1, b1 = linear(keys[0], 5, 128)
    w2, b2 = linear(keys[1], 128, 64)
    w3, b3 = linear(keys[2], 64, 32)
    wmu, bmu = linear(keys[3], 32, 1)
    wls, bls = linear(keys[4], 32, 1)
    return (w1, b1, w2, b2, w3, b3, wmu, bmu, wls, bls)


def reference_forward(instrument, m_obs, n_obs, params):
    """Pure-JAX reference (torch convention: y = x @ W.T + b) for correctness check."""
    (w1, b1, w2, b2, w3, b3, wmu, bmu, wls, bls) = params
    x = jnp.concatenate([instrument, m_obs, n_obs], axis=1).astype(jnp.float32)
    h = jnp.maximum(x @ w1.T + b1, 0.0)
    h = jnp.maximum(h @ w2.T + b2, 0.0)
    h = jnp.maximum(h @ w3.T + b3, 0.0)
    mu = h @ wmu.T + bmu
    scale = jnp.exp(h @ wls.T + bls) + 1e-8
    return mu, scale


if __name__ == "__main__":
    key = jax.random.PRNGKey(0)
    k_p, k_i, k_m, k_n = jax.random.split(key, 4)

    params = init_params(k_p)

    # instrument (2) + m_obs (2) + n_obs (1) = 5 input features.
    # B chosen non-divisible by the tile to exercise the cdiv/padding path,
    # and tile_b=128 so the test runs a multi-step grid.
    B = 300
    instrument = jax.random.normal(k_i, (B, 2), jnp.float32)
    m_obs = jax.random.normal(k_m, (B, 2), jnp.float32)
    n_obs = jax.random.normal(k_n, (B, 1), jnp.float32)

    mu, scale = encoder_forward(instrument, m_obs, n_obs, params, tile_b=128)
    jax.block_until_ready((mu, scale))

    mu_ref, scale_ref = reference_forward(instrument, m_obs, n_obs, params)
    assert mu.shape == (B, 1) and scale.shape == (B, 1)
    assert jnp.allclose(mu, mu_ref, atol=1e-4, rtol=1e-4), "mu mismatch"
    assert jnp.allclose(scale, scale_ref, atol=1e-4, rtol=1e-4), "scale mismatch"

    # TODO(synk): torch returns a Normal distribution object; here we return
    # its (loc, scale) parameters — sampling/log_prob can be done in plain JAX.
    print("KERNEL_OK")
</pallas_src>

<mosaic_0001>
module attributes {stable_mosaic.version = 11 : i64} {
  func.func @encoder_kernel(%arg0: i32, %arg1: memref<2x128xf32, #tpu.memory_space<vmem>>, %arg2: memref<2x128xf32, #tpu.memory_space<vmem>>, %arg3: memref<1x128xf32, #tpu.memory_space<vmem>>, %arg4: memref<128x8xf32, #tpu.memory_space<vmem>>, %arg5: memref<64x128xf32, #tpu.memory_space<vmem>>, %arg6: memref<64x1xf32, #tpu.memory_space<vmem>>, %arg7: memref<32x64xf32, #tpu.memory_space<vmem>>, %arg8: memref<32x1xf32, #tpu.memory_space<vmem>>, %arg9: memref<2x32xf32, #tpu.memory_space<vmem>>, %arg10: memref<2x1xf32, #tpu.memory_space<vmem>>, %arg11: memref<1x128xf32, #tpu.memory_space<vmem>>, %arg12: memref<1x128xf32, #tpu.memory_space<vmem>>, %arg13: memref<8x128xf32, #tpu.memory_space<vmem>>) attributes {dimension_semantics = [#tpu.dimension_semantics<parallel>], iteration_bounds = array<i64: 3>, scalar_prefetch = 0 : i64, scratch_operands = 1 : i64, tpu.core_type = #tpu.core_type<tc>, window_params = [{transform_indices = @transform_0, window_bounds = array<i64: 2, 128>}, {transform_indices = @transform_1, window_bounds = array<i64: 2, 128>}, {transform_indices = @transform_2, window_bounds = array<i64: 1, 128>}, {pipeline_mode = #tpu.pipeline_mode<synchronous>, transform_indices = @transform_3, window_bounds = array<i64: 128, 8>}, {pipeline_mode = #tpu.pipeline_mode<synchronous>, transform_indices = @transform_4, window_bounds = array<i64: 64, 128>}, {pipeline_mode = #tpu.pipeline_mode<synchronous>, transform_indices = @transform_5, window_bounds = array<i64: 64, 1>}, {pipeline_mode = #tpu.pipeline_mode<synchronous>, transform_indices = @transform_6, window_bounds = array<i64: 32, 64>}, {pipeline_mode = #tpu.pipeline_mode<synchronous>, transform_indices = @transform_7, window_bounds = array<i64: 32, 1>}, {pipeline_mode = #tpu.pipeline_mode<synchronous>, transform_indices = @transform_8, window_bounds = array<i64: 2, 32>}, {pipeline_mode = #tpu.pipeline_mode<synchronous>, transform_indices = @transform_9, window_bounds = array<i64: 2, 1>}, {transform_indices = @transform_10, window_bounds = array<i64: 1, 128>}, {transform_indices = @transform_11, window_bounds = array<i64: 1, 128>}]} {
    %c0 = arith.constant 0 : index
    %c0_0 = arith.constant 0 : index
    %0 = vector.load %arg1[%c0, %c0_0] : memref<2x128xf32, #tpu.memory_space<vmem>>, vector<2x128xf32>
    %c0_1 = arith.constant 0 : index
    %c0_2 = arith.constant 0 : index
    %1 = vector.load %arg13[%c0_1, %c0_2] : memref<8x128xf32, #tpu.memory_space<vmem>>, vector<2x128xf32>
    tpu.vector_store %arg13[%c0_1, %c0_2], %0 {strides = array<i32>} : memref<8x128xf32, #tpu.memory_space<vmem>>, vector<2x128xf32>,
    %c0_3 = arith.constant 0 : index
    %c0_4 = arith.constant 0 : index
    %2 = vector.load %arg2[%c0_3, %c0_4] : memref<2x128xf32, #tpu.memory_space<vmem>>, vector<2x128xf32>
    %c2 = arith.constant 2 : index
    %c0_5 = arith.constant 0 : index
    %3 = vector.load %arg13[%c2, %c0_5] : memref<8x128xf32, #tpu.memory_space<vmem>>, vector<2x128xf32>
    tpu.vector_store %arg13[%c2, %c0_5], %2 {strides = array<i32>} : memref<8x128xf32, #tpu.memory_space<vmem>>, vector<2x128xf32>,
    %c0_6 = arith.constant 0 : index
    %c0_7 = arith.constant 0 : index
    %4 = vector.load %arg3[%c0_6, %c0_7] : memref<1x128xf32, #tpu.memory_space<vmem>>, vector<1x128xf32>
    %c4 = arith.constant 4 : index
    %c0_8 = arith.constant 0 : index
    %5 = vector.load %arg13[%c4, %c0_8] : memref<8x128xf32, #tpu.memory_space<vmem>>, vector<1x128xf32>
    tpu.vector_store %arg13[%c4, %c0_8], %4 {strides = array<i32>} : memref<8x128xf32, #tpu.memory_space<vmem>>, vector<1x128xf32>,
    %cst = arith.constant 1.000000e+00 : f32
    %6 = vector.broadcast %cst : f32 to vector<1x128xf32>
    %c5 = arith.constant 5 : index
    %c0_9 = arith.constant 0 : index
    %7 = vector.load %arg13[%c5, %c0_9] : memref<8x128xf32, #tpu.memory_space<vmem>>, vector<1x128xf32>
    tpu.vector_store %arg13[%c5, %c0_9], %6 {strides = array<i32>} : memref<8x128xf32, #tpu.memory_space<vmem>>, vector<1x128xf32>,
    %cst_10 = arith.constant 0.000000e+00 : f32
    %8 = vector.broadcast %cst_10 : f32 to vector<2x128xf32>
    %c6 = arith.constant 6 : index
    %c0_11 = arith.constant 0 : index
    %9 = vector.load %arg13[%c6, %c0_11] : memref<8x128xf32, #tpu.memory_space<vmem>>, vector<2x128xf32>
    tpu.vector_store %arg13[%c6, %c0_11], %8 {strides = array<i32>} : memref<8x128xf32, #tpu.memory_space<vmem>>, vector<2x128xf32>,
    %c0_12 = arith.constant 0 : index
    %c0_13 = arith.constant 0 : index
    %10 = vector.load %arg4[%c0_12, %c0_13] : memref<128x8xf32, #tpu.memory_space<vmem>>, vector<128x8xf32>
    %c0_14 = arith.constant 0 : index
    %c0_15 = arith.constant 0 : index
    %11 = vector.load %arg13[%c0_14, %c0_15] : memref<8x128xf32, #tpu.memory_space<vmem>>, vector<8x128xf32>
    %cst_16 = arith.constant dense<0.000000e+00> : vector<128x128xf32>
    %12 = tpu.matmul %10, %11, %cst_16 {dimension_numbers = #tpu.dot_dimension_numbers<[1], [0], [0], [1], [0, 0, 1, 1], [], []>} : vector<128x8xf32>, vector<8x128xf32>, vector<128x128xf32> -> vector<128x128xf32>
    %cst_17 = arith.constant 0.000000e+00 : f32
    %13 = vector.broadcast %cst_17 : f32 to vector<128x128xf32>
    %14 = arith.maximumf %12, %13 : vector<128x128xf32>
    %c0_18 = arith.constant 0 : index
    %c0_19 = arith.constant 0 : index
    %15 = vector.load %arg5[%c0_18, %c0_19] : memref<64x128xf32, #tpu.memory_space<vmem>>, vector<64x128xf32>
    %cst_20 = arith.constant dense<0.000000e+00> : vector<64x128xf32>
    %16 = tpu.matmul %15, %14, %cst_20 {dimension_numbers = #tpu.dot_dimension_numbers<[1], [0], [0], [1], [0, 0, 1, 1], [], []>} : vector<64x128xf32>, vector<128x128xf32>, vector<64x128xf32> -> vector<64x128xf32>
    %c0_21 = arith.constant 0 : index
    %c0_22 = arith.constant 0 : index
    %17 = vector.load %arg6[%c0_21, %c0_22] : memref<64x1xf32, #tpu.memory_space<vmem>>, vector<64x1xf32>
    %18 = vector.broadcast %17 : vector<64x1xf32> to vector<64x128xf32>
    %19 = arith.addf %16, %18 : vector<64x128xf32>
    %cst_23 = arith.constant 0.000000e+00 : f32
    %20 = vector.broadcast %cst_23 : f32 to vector<64x128xf32>
    %21 = arith.maximumf %19, %20 : vector<64x128xf32>
    %c0_24 = arith.constant 0 : index
    %c0_25 = arith.constant 0 : index
    %22 = vector.load %arg7[%c0_24, %c0_25] : memref<32x64xf32, #tpu.memory_space<vmem>>, vector<32x64xf32>
    %cst_26 = arith.constant dense<0.000000e+00> : vector<32x128xf32>
    %23 = tpu.matmul %22, %21, %cst_26 {dimension_numbers = #tpu.dot_dimension_numbers<[1], [0], [0], [1], [0, 0, 1, 1], [], []>} : vector<32x64xf32>, vector<64x128xf32>, vector<32x128xf32> -> vector<32x128xf32>
    %c0_27 = arith.constant 0 : index
    %c0_28 = arith.constant 0 : index
    %24 = vector.load %arg8[%c0_27, %c0_28] : memref<32x1xf32, #tpu.memory_space<vmem>>, vector<32x1xf32>
    %25 = vector.broadcast %24 : vector<32x1xf32> to vector<32x128xf32>
    %26 = arith.addf %23, %25 : vector<32x128xf32>
    %cst_29 = arith.constant 0.000000e+00 : f32
    %27 = vector.broadcast %cst_29 : f32 to vector<32x128xf32>
    %28 = arith.maximumf %26, %27 : vector<32x128xf32>
    %c0_30 = arith.constant 0 : index
    %c0_31 = arith.constant 0 : index
    %29 = vector.load %arg9[%c0_30, %c0_31] : memref<2x32xf32, #tpu.memory_space<vmem>>, vector<2x32xf32>
    %cst_32 = arith.constant dense<0.000000e+00> : vector<2x128xf32>
    %30 = tpu.matmul %29, %28, %cst_32 {dimension_numbers = #tpu.dot_dimension_numbers<[1], [0], [0], [1], [0, 0, 1, 1], [], []>} : vector<2x32xf32>, vector<32x128xf32>, vector<2x128xf32> -> vector<2x128xf32>
    %c0_33 = arith.constant 0 : index
    %c0_34 = arith.constant 0 : index
    %31 = vector.load %arg10[%c0_33, %c0_34] : memref<2x1xf32, #tpu.memory_space<vmem>>, vector<2x1xf32>
    %32 = vector.broadcast %31 : vector<2x1xf32> to vector<2x128xf32>
    %33 = arith.addf %30, %32 : vector<2x128xf32>
    %34 = vector.extract_strided_slice %33 {offsets = [0, 0], sizes = [1, 128], strides = [1, 1]} : vector<2x128xf32> to vector<1x128xf32>
    %c0_35 = arith.constant 0 : index
    %c0_36 = arith.constant 0 : index
    %35 = vector.load %arg11[%c0_35, %c0_36] : memref<1x128xf32, #tpu.memory_space<vmem>>, vector<1x128xf32>
    tpu.vector_store %arg11[%c0_35, %c0_36], %34 {strides = array<i32>} : memref<1x128xf32, #tpu.memory_space<vmem>>, vector<1x128xf32>,
    %36 = vector.extract_strided_slice %33 {offsets = [1, 0], sizes = [1, 128], strides = [1, 1]} : vector<2x128xf32> to vector<1x128xf32>
    %37 = math.exp %36 : vector<1x128xf32>
    %cst_37 = arith.constant 9.99999993E-9 : f32
    %38 = vector.broadcast %cst_37 : f32 to vector<1x128xf32>
    %39 = arith.addf %37, %38 : vector<1x128xf32>
    %c0_38 = arith.constant 0 : index
    %c0_39 = arith.constant 0 : index
    %40 = vector.load %arg12[%c0_38, %c0_39] : memref<1x128xf32, #tpu.memory_space<vmem>>, vector<1x128xf32>
    tpu.vector_store %arg12[%c0_38, %c0_39], %39 {strides = array<i32>} : memref<1x128xf32, #tpu.memory_space<vmem>>, vector<1x128xf32>,
    return
  }
  func.func @transform_0(%arg0: i32) -> (i32, i32) {
    %c0_i32 = arith.constant 0 : i32
    %c0_i32_0 = arith.constant 0 : i32
    return %c0_i32, %arg0 : i32, i32
  }
  func.func @transform_1(%arg0: i32) -> (i32, i32) {
    %c0_i32 = arith.constant 0 : i32
    %c0_i32_0 = arith.constant 0 : i32
    return %c0_i32, %arg0 : i32, i32
  }
  func.func @transform_2(%arg0: i32) -> (i32, i32) {
    %c0_i32 = arith.constant 0 : i32
    %c0_i32_0 = arith.constant 0 : i32
    return %c0_i32, %arg0 : i32, i32
  }
  func.func @transform_3(%arg0: i32) -> (i32, i32) {
    %c0_i32 = arith.constant 0 : i32
    %c0_i32_0 = arith.constant 0 : i32
    %c0_i32_1 = arith.constant 0 : i32
    return %c0_i32, %c0_i32_0 : i32, i32
  }
  func.func @transform_4(%arg0: i32) -> (i32, i32) {
    %c0_i32 = arith.constant 0 : i32
    %c0_i32_0 = arith.constant 0 : i32
    %c0_i32_1 = arith.constant 0 : i32
    return %c0_i32, %c0_i32_0 : i32, i32
  }
  func.func @transform_5(%arg0: i32) -> (i32, i32) {
    %c0_i32 = arith.constant 0 : i32
    %c0_i32_0 = arith.constant 0 : i32
    %c0_i32_1 = arith.constant 0 : i32
    return %c0_i32, %c0_i32_0 : i32, i32
  }
  func.func @transform_6(%arg0: i32) -> (i32, i32) {
    %c0_i32 = arith.constant 0 : i32
    %c0_i32_0 = arith.constant 0 : i32
    %c0_i32_1 = arith.constant 0 : i32
    return %c0_i32, %c0_i32_0 : i32, i32
  }
  func.func @transform_7(%arg0: i32) -> (i32, i32) {
    %c0_i32 = arith.constant 0 : i32
    %c0_i32_0 = arith.constant 0 : i32
    %c0_i32_1 = arith.constant 0 : i32
    return %c0_i32, %c0_i32_0 : i32, i32
  }
  func.func @transform_8(%arg0: i32) -> (i32, i32) {
    %c0_i32 = arith.constant 0 : i32
    %c0_i32_0 = arith.constant 0 : i32
    %c0_i32_1 = arith.constant 0 : i32
    return %c0_i32, %c0_i32_0 : i32, i32
  }
  func.func @transform_9(%arg0: i32) -> (i32, i32) {
    %c0_i32 = arith.constant 0 : i32
    %c0_i32_0 = arith.constant 0 : i32
    %c0_i32_1 = arith.constant 0 : i32
    return %c0_i32, %c0_i32_0 : i32, i32
  }
  func.func @transform_10(%arg0: i32) -> (i32, i32) {
    %c0_i32 = arith.constant 0 : i32
    %c0_i32_0 = arith.constant 0 : i32
    return %c0_i32, %arg0 : i32, i32
  }
  func.func @transform_11(%arg0: i32) -> (i32, i32) {
    %c0_i32 = arith.constant 0 : i32
    %c0_i32_0 = arith.constant 0 : i32
    return %c0_i32, %arg0 : i32, i32
  }
}

</mosaic_0001>

<llo_original>
// kernel: encoder_forward.1
$region0: #{encoder_forward.1}
  #allocation0 [shape = 'u32[]', space=smem, size = 0x4, offset = 0x4, fixed_abs, tag = 'smem constant byte address 0x4 - core index']
  #allocation1 [shape = 'u32[144,128]{1,0:T(1,128)}', space=vmem, size = 0x12000, scoped, tag = 'internal scratch']
  #allocation2 [shape = 'f32[8,128]{1,0:T(8,128)}', space=vmem, size = 0x1000, scoped, tag = 'scratch operand']
  %s0 = inlined_call_operand.vmem [shape: f32[2,384], index: 0, kind: input, shape index: {}]
  %s1 = inlined_call_operand.vmem [shape: f32[2,384], index: 1, kind: input, shape index: {}]
  %s2 = inlined_call_operand.vmem [shape: f32[1,384], index: 2, kind: input, shape index: {}]
  %s3 = inlined_call_operand.vmem [shape: f32[128,8], index: 3, kind: input, shape index: {}]
  %s4 = inlined_call_operand.vmem [shape: f32[64,128], index: 4, kind: input, shape index: {}]
  %s5 = inlined_call_operand.vmem [shape: f32[64,1], index: 5, kind: input, shape index: {}]
  %s6 = inlined_call_operand.vmem [shape: f32[32,64], index: 6, kind: input, shape index: {}]
  %s7 = inlined_call_operand.vmem [shape: f32[32,1], index: 7, kind: input, shape index: {}]
  %s8 = inlined_call_operand.vmem [shape: f32[2,32], index: 8, kind: input, shape index: {}]
  %s9 = inlined_call_operand.vmem [shape: f32[2,1], index: 9, kind: input, shape index: {}]
  %s10 = inlined_call_operand.vmem [shape: f32[1,384], index: 10, kind: output, shape index: {0}]
  %s11 = inlined_call_operand.vmem [shape: f32[1,384], index: 11, kind: output, shape index: {1}]
  %12 = xla_tuple %s10, %s11
  %s13 = sld [smem:[#allocation0]]
  $region81: #{encoder_forward.1} parent=0
    _
  %s15 = ssub.s32 1, %s13
  %s16 = scalar_select 0, %s15, %s13
  loop: start=0, step=1, limit=5
  $region2: #{encoder_forward.1} parent=0 // loop_pre_header
    _
  $region3: #{encoder_forward.1} parent=0 // loop_header
    %s18 = sphi 0, %s22
    %p19 = scmp.ge.s32.totalorder %s18, 5
    %s28 = sphi 0, %s30
    %s31 = sphi 0, %s28
    %s32 = sphi 0, %s31
    %s48 = sphi 0, %s32
    %s54 = sphi 0, %s56
    %s57 = sphi 0, %s54
    %s58 = sphi 0, %s57
    %s74 = sphi 0, %s58
    %s80 = sphi 0, %s82
    %s83 = sphi 0, %s80
    %s84 = sphi 0, %s83
    %s100 = sphi 0, %s84
    %s104 = sphi 0, %s104
    %s106 = sphi 0, %s104
    %s107 = sphi 0, %s106
    %s121 = sphi 0, %s107
    %s125 = sphi 0, %s125
    %s127 = sphi 0, %s125
    %s128 = sphi 0, %s127
    %s142 = sphi 0, %s128
    %s146 = sphi 0, %s146
    %s148 = sphi 0, %s146
    %s149 = sphi 0, %s148
    %s163 = sphi 0, %s149
    %s167 = sphi 0, %s167
    %s169 = sphi 0, %s167
    %s170 = sphi 0, %s169
    %s184 = sphi 0, %s170
    %s188 = sphi 0, %s188
    %s190 = sphi 0, %s188
    %s191 = sphi 0, %s190
    %s205 = sphi 0, %s191
    %s209 = sphi 0, %s209
    %s211 = sphi 0, %s209
    %s212 = sphi 0, %s211
    %s226 = sphi 0, %s212
    %s230 = sphi 0, %s230
    %s232 = sphi 0, %s230
    %s233 = sphi 0, %s232
    %s247 = sphi 0, %s233
    %s253 = sphi 0, %s255
    %s256 = sphi 0, %s253
    %s257 = sphi 0, %s256
    %s273 = sphi 0, %s257
    %s279 = sphi 0, %s281
    %s282 = sphi 0, %s279
    %s283 = sphi 0, %s282
    %s299 = sphi 0, %s283
  $region4: #{encoder_forward.1} parent=0 // loop_header_branch
    %21 = sbr.rel (%p19) target = $region8
  $region5: #{encoder_forward.1} parent=0 // loop_body
    %s23 = ssub.s32 %s18, 1
    %s24 = ssub.s32 %s18, 2
    %s25 = sadd.s32 %s18, 1
    %s26 = ssub.s32 %s18, %s25
    %p27 = scmp.eq.s32.totalorder %s26, 0
    %s29 = sadd.s32 %s28, 1
    %s30 = scalar_select %p27, %s28, %s29
    %p33 = pneg %p27
    %p34 = scmp.eq.s32.totalorder %s18, 2
    %p35 = por %p33, %p34
    %p36 = scmp.ne.s32.totalorder %s28, %s31
    %p37 = scmp.eq.s32.totalorder %s18, 0
    %p38 = por %p36, %p37
    %p39 = scmp.ne.s32.totalorder %s28, %s31
    %p40 = scmp.eq.s32.totalorder %s23, 2
    %p41 = por %p39, %p40
    %p42 = scmp.ne.s32.totalorder %s31, %s32
    %p43 = scmp.eq.s32.totalorder %s23, 0
    %p44 = por %p42, %p43
    %p45 = scmp.ne.s32.totalorder %s31, %s32
    %p46 = scmp.eq.s32.totalorder %s24, 2
    %p47 = por %p45, %p46
    %p49 = scmp.ne.s32.totalorder %s32, %s48
    %p50 = scmp.eq.s32.totalorder %s24, 0
    %p51 = por %p49, %p50
    %s52 = ssub.s32 %s18, %s25
    %p53 = scmp.eq.s32.totalorder %s52, 0
    %s55 = sadd.s32 %s54, 1
    %s56 = scalar_select %p53, %s54, %s55
    %p59 = pneg %p53
    %p60 = scmp.eq.s32.totalorder %s18, 2
    %p61 = por %p59, %p60
    %p62 = scmp.ne.s32.totalorder %s54, %s57
    %p63 = scmp.eq.s32.totalorder %s18, 0
    %p64 = por %p62, %p63
    %p65 = scmp.ne.s32.totalorder %s54, %s57
    %p66 = scmp.eq.s32.totalorder %s23, 2
    %p67 = por %p65, %p66
    %p68 = scmp.ne.s32.totalorder %s57, %s58
    %p69 = scmp.eq.s32.totalorder %s23, 0
    %p70 = por %p68, %p69
    %p71 = scmp.ne.s32.totalorder %s57, %s58
    %p72 = scmp.eq.s32.totalorder %s24, 2
    %p73 = por %p71, %p72
    %p75 = scmp.ne.s32.totalorder %s58, %s74
    %p76 = scmp.eq.s32.totalorder %s24, 0
    %p77 = por %p75, %p76
    %s78 = ssub.s32 %s18, %s25
    %p79 = scmp.eq.s32.totalorder %s78, 0
    %s81 = sadd.s32 %s80, 1
    %s82 = scalar_select %p79, %s80, %s81
    %p85 = pneg %p79
    %p86 = scmp.eq.s32.totalorder %s18, 2
    %p87 = por %p85, %p86
    %p88 = scmp.ne.s32.totalorder %s80, %s83
    %p89 = scmp.eq.s32.totalorder %s18, 0
    %p90 = por %p88, %p89
    %p91 = scmp.ne.s32.totalorder %s80, %s83
    %p92 = scmp.eq.s32.totalorder %s23, 2
    %p93 = por %p91, %p92
    %p94 = scmp.ne.s32.totalorder %s83, %s84
    %p95 = scmp.eq.s32.totalorder %s23, 0
    %p96 = por %p94, %p95
    %p97 = scmp.ne.s32.totalorder %s83, %s84
    %p98 = scmp.eq.s32.totalorder %s24, 2
    %p99 = por %p97, %p98
    %p101 = scmp.ne.s32.totalorder %s84, %s100
    %p102 = scmp.eq.s32.totalorder %s24, 0
    %p103 = por %p101, %p102
    %s105 = sadd.s32 %s104, 1
    %p108 = scmp.eq.s32.totalorder %s18, 2
    %p109 = scmp.ne.s32.totalorder %s104, %s106
    %p110 = scmp.eq.s32.totalorder %s18, 0
    %p111 = por %p109, %p110
    %p112 = scmp.ne.s32.totalorder %s104, %s106
    %p113 = scmp.eq.s32.totalorder %s23, 2
    %p114 = por %p112, %p113
    %p115 = scmp.ne.s32.totalorder %s106, %s107
    %p116 = scmp.eq.s32.totalorder %s23, 0
    %p117 = por %p115, %p116
    %p118 = scmp.ne.s32.totalorder %s106, %s107
    %p119 = scmp.eq.s32.totalorder %s24, 2
    %p120 = por %p118, %p119
    %p122 = scmp.ne.s32.totalorder %s107, %s121
    %p123 = scmp.eq.s32.totalorder %s24, 0
    %p124 = por %p122, %p123
    %s126 = sadd.s32 %s125, 1
    %p129 = scmp.eq.s32.totalorder %s18, 2
    %p130 = scmp.ne.s32.totalorder %s125, %s127
    %p131 = scmp.eq.s32.totalorder %s18, 0
    %p132 = por %p130, %p131
    %p133 = scmp.ne.s32.totalorder %s125, %s127
    %p134 = scmp.eq.s32.totalorder %s23, 2
    %p135 = por %p133, %p134
    %p136 = scmp.ne.s32.totalorder %s127, %s128
    %p137 = scmp.eq.s32.totalorder %s23, 0
    %p138 = por %p136, %p137
    %p139 = scmp.ne.s32.totalorder %s127, %s128
    %p140 = scmp.eq.s32.totalorder %s24, 2
    %p141 = por %p139, %p140
    %p143 = scmp.ne.s32.totalorder %s128, %s142
    %p144 = scmp.eq.s32.totalorder %s24, 0
    %p145 = por %p143, %p144
    %s147 = sadd.s32 %s146, 1
    %p150 = scmp.eq.s32.totalorder %s18, 2
    %p151 = scmp.ne.s32.totalorder %s146, %s148
    %p152 = scmp.eq.s32.totalorder %s18, 0
    %p153 = por %p151, %p152
    %p154 = scmp.ne.s32.totalorder %s146, %s148
    %p155 = scmp.eq.s32.totalorder %s23, 2
    %p156 = por %p154, %p155
    %p157 = scmp.ne.s32.totalorder %s148, %s149
    %p158 = scmp.eq.s32.totalorder %s23, 0
    %p159 = por %p157, %p158
    %p160 = scmp.ne.s32.totalorder %s148, %s149
    %p161 = scmp.eq.s32.totalorder %s24, 2
    %p162 = por %p160, %p161
    %p164 = scmp.ne.s32.totalorder %s149, %s163
    %p165 = scmp.eq.s32.totalorder %s24, 0
    %p166 = por %p164, %p165
    %s168 = sadd.s32 %s167, 1
    %p171 = scmp.eq.s32.totalorder %s18, 2
    %p172 = scmp.ne.s32.totalorder %s167, %s169
    %p173 = scmp.eq.s32.totalorder %s18, 0
    %p174 = por %p172, %p173
    %p175 = scmp.ne.s32.totalorder %s167, %s169
    %p176 = scmp.eq.s32.totalorder %s23, 2
    %p177 = por %p175, %p176
    %p178 = scmp.ne.s32.totalorder %s169, %s170
    %p179 = scmp.eq.s32.totalorder %s23, 0
    %p180 = por %p178, %p179
    %p181 = scmp.ne.s32.totalorder %s169, %s170
    %p182 = scmp.eq.s32.totalorder %s24, 2
    %p183 = por %p181, %p182
    %p185 = scmp.ne.s32.totalorder %s170, %s184
    %p186 = scmp.eq.s32.totalorder %s24, 0
    %p187 = por %p185, %p186
    %s189 = sadd.s32 %s188, 1
    %p192 = scmp.eq.s32.totalorder %s18, 2
    %p193 = scmp.ne.s32.totalorder %s188, %s190
    %p194 = scmp.eq.s32.totalorder %s18, 0
    %p195 = por %p193, %p194
    %p196 = scmp.ne.s32.totalorder %s188, %s190
    %p197 = scmp.eq.s32.totalorder %s23, 2
    %p198 = por %p196, %p197
    %p199 = scmp.ne.s32.totalorder %s190, %s191
    %p200 = scmp.eq.s32.totalorder %s23, 0
    %p201 = por %p199, %p200
    %p202 = scmp.ne.s32.totalorder %s190, %s191
    %p203 = scmp.eq.s32.totalorder %s24, 2
    %p204 = por %p202, %p203
    %p206 = scmp.ne.s32.totalorder %s191, %s205
    %p207 = scmp.eq.s32.totalorder %s24, 0
    %p208 = por %p206, %p207
    %s210 = sadd.s32 %s209, 1
    %p213 = scmp.eq.s32.totalorder %s18, 2
    %p214 = scmp.ne.s32.totalorder %s209, %s211
    %p215 = scmp.eq.s32.totalorder %s18, 0
    %p216 = por %p214, %p215
    %p217 = scmp.ne.s32.totalorder %s209, %s211
    %p218 = scmp.eq.s32.totalorder %s23, 2
    %p219 = por %p217, %p218
    %p220 = scmp.ne.s32.totalorder %s211, %s212
    %p221 = scmp.eq.s32.totalorder %s23, 0
    %p222 = por %p220, %p221
    %p223 = scmp.ne.s32.totalorder %s211, %s212
    %p224 = scmp.eq.s32.totalorder %s24, 2
    %p225 = por %p223, %p224
    %p227 = scmp.ne.s32.totalorder %s212, %s226
    %p228 = scmp.eq.s32.totalorder %s24, 0
    %p229 = por %p227, %p228
    %s231 = sadd.s32 %s230, 1
    %p234 = scmp.eq.s32.totalorder %s18, 2
    %p235 = scmp.ne.s32.totalorder %s230, %s232
    %p236 = scmp.eq.s32.totalorder %s18, 0
    %p237 = por %p235, %p236
    %p238 = scmp.ne.s32.totalorder %s230, %s232
    %p239 = scmp.eq.s32.totalorder %s23, 2
    %p240 = por %p238, %p239
    %p241 = scmp.ne.s32.totalorder %s232, %s233
    %p242 = scmp.eq.s32.totalorder %s23, 0
    %p243 = por %p241, %p242
    %p244 = scmp.ne.s32.totalorder %s232, %s233
    %p245 = scmp.eq.s32.totalorder %s24, 2
    %p246 = por %p244, %p245
    %p248 = scmp.ne.s32.totalorder %s233, %s247
    %p249 = scmp.eq.s32.totalorder %s24, 0
    %p250 = por %p248, %p249
    %s251 = ssub.s32 %s18, %s25
    %p252 = scmp.eq.s32.totalorder %s251, 0
    %s254 = sadd.s32 %s253, 1
    %s255 = scalar_select %p252, %s253, %s254
    %p258 = pneg %p252
    %p259 = scmp.eq.s32.totalorder %s18, 2
    %p260 = por %p258, %p259
    %p261 = scmp.ne.s32.totalorder %s253, %s256
    %p262 = scmp.eq.s32.totalorder %s18, 0
    %p263 = por %p261, %p262
    %p264 = scmp.ne.s32.totalorder %s253, %s256
    %p265 = scmp.eq.s32.totalorder %s23, 2
    %p266 = por %p264, %p265
    %p267 = scmp.ne.s32.totalorder %s256, %s257
    %p268 = scmp.eq.s32.totalorder %s23, 0
    %p269 = por %p267, %p268
    %p270 = scmp.ne.s32.totalorder %s256, %s257
    %p271 = scmp.eq.s32.totalorder %s24, 2
    %p272 = por %p270, %p271
    %p274 = scmp.ne.s32.totalorder %s257, %s273
    %p275 = scmp.eq.s32.totalorder %s24, 0
    %p276 = por %p274, %p275
    %s277 = ssub.s32 %s18, %s25
    %p278 = scmp.eq.s32.totalorder %s277, 0
    %s280 = sadd.s32 %s279, 1
    %s281 = scalar_select %p278, %s279, %s280
    %p284 = pneg %p278
    %p285 = scmp.eq.s32.totalorder %s18, 2
    %p286 = por %p284, %p285
    %p287 = scmp.ne.s32.totalorder %s279, %s282
    %p288 = scmp.eq.s32.totalorder %s18, 0
    %p289 = por %p287, %p288
    %p290 = scmp.ne.s32.totalorder %s279, %s282
    %p291 = scmp.eq.s32.totalorder %s23, 2
    %p292 = por %p290, %p291
    %p293 = scmp.ne.s32.totalorder %s282, %s283
    %p294 = scmp.eq.s32.totalorder %s23, 0
    %p295 = por %p293, %p294
    %p296 = scmp.ne.s32.totalorder %s282, %s283
    %p297 = scmp.eq.s32.totalorder %s24, 2
    %p298 = por %p296, %p297
    %p300 = scmp.ne.s32.totalorder %s283, %s299
    %p301 = scmp.eq.s32.totalorder %s24, 0
    %p302 = por %p300, %p301
    %p303 = scmp.le.s32.totalorder 1, %s18
    %p304 = scmp.lt.s32.totalorder %s18, 4
    %p305 = pnand %p303, %p304
    %p306 = pneg %p305
    // Predicated region
    $region9: #{encoder_forward.1} parent=5 // pred_check
      _
    $region10: #{encoder_forward.1} parent=5 // pred_check_branch
      %308 = sbr.rel (%p305) target = $region12
    $region11: #{encoder_forward.1} parent=5 // pred_region
      %s309 = ssub.s32 %s18, 1
      // Predicated region
      $region13: #{encoder_forward.1} parent=11 // pred_check
        %p310 = pneg %p117
      $region14: #{encoder_forward.1} parent=11 // pred_check_branch
        %312 = sbr.rel (%p310) target = $region16
      $region15: #{encoder_forward.1} parent=11 // pred_region
        _
      $region16: #{encoder_forward.1} parent=11 // pred_fallthru
        _
      // Predicated region
      $region17: #{encoder_forward.1} parent=11 // pred_check
        %p313 = pneg %p138
      $region18: #{encoder_forward.1} parent=11 // pred_check_branch
        %315 = sbr.rel (%p313) target = $region20
      $region19: #{encoder_forward.1} parent=11 // pred_region
        _
      $region20: #{encoder_forward.1} parent=11 // pred_fallthru
        _
      // Predicated region
      $region21: #{encoder_forward.1} parent=11 // pred_check
        %p316 = pneg %p159
      $region22: #{encoder_forward.1} parent=11 // pred_check_branch
        %318 = sbr.rel (%p316) target = $region24
      $region23: #{encoder_forward.1} parent=11 // pred_region
        _
      $region24: #{encoder_forward.1} parent=11 // pred_fallthru
        _
      // Predicated region
      $region25: #{encoder_forward.1} parent=11 // pred_check
        %p319 = pneg %p180
      $region26: #{encoder_forward.1} parent=11 // pred_check_branch
        %321 = sbr.rel (%p319) target = $region28
      $region27: #{encoder_forward.1} parent=11 // pred_region
        _
      $region28: #{encoder_forward.1} parent=11 // pred_fallthru
        _
      // Predicated region
      $region29: #{encoder_forward.1} parent=11 // pred_check
        %p322 = pneg %p201
      $region30: #{encoder_forward.1} parent=11 // pred_check_branch
        %324 = sbr.rel (%p322) target = $region32
      $region31: #{encoder_forward.1} parent=11 // pred_region
        _
      $region32: #{encoder_forward.1} parent=11 // pred_fallthru
        _
      // Predicated region
      $region33: #{encoder_forward.1} parent=11 // pred_check
        %p325 = pneg %p222
      $region34: #{encoder_forward.1} parent=11 // pred_check_branch
        %327 = sbr.rel (%p325) target = $region36
      $region35: #{encoder_forward.1} parent=11 // pred_region
        _
      $region36: #{encoder_forward.1} parent=11 // pred_fallthru
        _
      // Predicated region
      $region37: #{encoder_forward.1} parent=11 // pred_check
        %p328 = pneg %p243
      $region38: #{encoder_forward.1} parent=11 // pred_check_branch
        %330 = sbr.rel (%p328) target = $region40
      $region39: #{encoder_forward.1} parent=11 // pred_region
        _
      $region40: #{encoder_forward.1} parent=11 // pred_fallthru
        _
    $region12: #{encoder_forward.1} parent=5 // pred_fallthru
      _
    %p331 = scmp.lt.s32.totalorder %s18, 3
    // Predicated region
    $region41: #{encoder_forward.1} parent=5 // pred_check
      %p332 = pneg %p331
    $region42: #{encoder_forward.1} parent=5 // pred_check_branch
      %334 = sbr.rel (%p332) target = $region44
    $region43: #{encoder_forward.1} parent=5 // pred_region
      // Predicated region
      $region45: #{encoder_forward.1} parent=43 // pred_check
        %p335 = pneg %p38
      $region46: #{encoder_forward.1} parent=43 // pred_check_branch
        %337 = sbr.rel (%p335) target = $region48
      $region47: #{encoder_forward.1} parent=43 // pred_region
        %p338 = scmp.lt.s32.totalorder %s18, 2
        %s339 = scalar_select %p338, %s18, 2
        %s340 = smul.addr %s339, 2
        %s341 = scalar_lea.vmem %s0, %s340
      $region48: #{encoder_forward.1} parent=43 // pred_fallthru
        _
      // Predicated region
      $region49: #{encoder_forward.1} parent=43 // pred_check
        %p342 = pneg %p64
      $region50: #{encoder_forward.1} parent=43 // pred_check_branch
        %344 = sbr.rel (%p342) target = $region52
      $region51: #{encoder_forward.1} parent=43 // pred_region
        %p345 = scmp.lt.s32.totalorder %s18, 2
        %s346 = scalar_select %p345, %s18, 2
        %s347 = smul.addr %s346, 2
        %s348 = scalar_lea.vmem %s1, %s347
      $region52: #{encoder_forward.1} parent=43 // pred_fallthru
        _
      // Predicated region
      $region53: #{encoder_forward.1} parent=43 // pred_check
        %p349 = pneg %p90
      $region54: #{encoder_forward.1} parent=43 // pred_check_branch
        %351 = sbr.rel (%p349) target = $region56
      $region55: #{encoder_forward.1} parent=43 // pred_region
        %p352 = scmp.lt.s32.totalorder %s18, 2
        %s353 = scalar_select %p352, %s18, 2
        %s354 = scalar_lea.vmem %s2, %s353
      $region56: #{encoder_forward.1} parent=43 // pred_fallthru
        _
    $region44: #{encoder_forward.1} parent=5 // pred_fallthru
      _
    %p355 = scmp.le.s32.totalorder 1, %s18
    %p356 = scmp.lt.s32.totalorder %s18, 4
    %p357 = pnand %p355, %p356
    %p358 = pneg %p357
    // Predicated region
    $region57: #{encoder_forward.1} parent=5 // pred_check
      _
    $region58: #{encoder_forward.1} parent=5 // pred_check_branch
      %360 = sbr.rel (%p357) target = $region60
    $region59: #{encoder_forward.1} parent=5 // pred_region
      %s361 = ssub.s32 %s18, 1
      %p362 = scmp.lt.s32.totalorder %s23, 2
      %s363 = scalar_select %p362, %s23, 2
      %s364 = smul.addr %s363, 2
      %s365 = scalar_lea.vmem %s0, %s364
      %p366 = pneg %p44
      %p367 = pneg %p41
      %p368 = scmp.lt.s32.totalorder %s23, 2
      %s369 = scalar_select %p368, %s23, 2
      %s370 = smul.addr %s369, 2
      %s371 = scalar_lea.vmem %s1, %s370
      %p372 = pneg %p70
      %p373 = pneg %p67
      %p374 = scmp.lt.s32.totalorder %s23, 2
      %s375 = scalar_select %p374, %s23, 2
      %s376 = scalar_lea.vmem %s2, %s375
      %p377 = pneg %p96
      %p378 = pneg %p93
      %p379 = pneg %p117
      %p380 = pneg %p114
      %p381 = pneg %p138
      %p382 = pneg %p135
      %p383 = pneg %p159
      %p384 = pneg %p156
      %p385 = pneg %p180
      %p386 = pneg %p177
      %p387 = pneg %p201
      %p388 = pneg %p198
      %p389 = pneg %p222
      %p390 = pneg %p219
      %p391 = pneg %p243
      %p392 = pneg %p240
      %p393 = pneg %p269
      %p394 = pneg %p266
      %p395 = scmp.lt.s32.totalorder %s23, 2
      %s396 = scalar_select %p395, %s23, 2
      %s397 = scalar_lea.vmem %s10, %s396
      %p398 = pneg %p295
      %p399 = pneg %p292
      %p400 = scmp.lt.s32.totalorder %s23, 2
      %s401 = scalar_select %p400, %s23, 2
      %s402 = scalar_lea.vmem %s11, %s401
      %p403 = scmp.lt.s32.totalorder %s23, 2
      %s404 = scalar_select %p403, %s23, 2
      %s405 = smul.addr %s404, 2
      %s406 = scalar_lea.vmem %s0, %s405
      %p407 = scmp.lt.s32.totalorder %s23, 2
      %s408 = scalar_select %p407, %s23, 2
      %s409 = smul.addr %s408, 2
      %s410 = scalar_lea.vmem %s1, %s409
      %p411 = scmp.lt.s32.totalorder %s23, 2
      %s412 = scalar_select %p411, %s23, 2
      %s413 = scalar_lea.vmem %s2, %s412
      %p414 = scmp.lt.s32.totalorder %s23, 2
      %s415 = scalar_select %p414, %s23, 2
      %s416 = scalar_lea.vmem %s10, %s415
      %p417 = scmp.lt.s32.totalorder %s23, 2
      %s418 = scalar_select %p417, %s23, 2
      %s419 = scalar_lea.vmem %s11, %s418
      %v420 = vld [vmem:[%s406] sm:$0x3]
      %421 = vst [vmem:[#allocation2] sm:$0x3] %v420
      %v422 = vld [vmem:[%s410] sm:$0x3]
      %423 = vst [vmem:[#allocation2 + $0x2] sm:$0x3] %v422
      %v424 = vld [vmem:[%s413] sm:$0x1]
      %425 = vst [vmem:[#allocation2 + $0x4] sm:$0x1] %v424
      %426 = vst [vmem:[#allocation2 + $0x5] sm:$0x1] 1.0
      %427 = vst [vmem:[#allocation2 + $0x6] sm:$0x3] 0.0
      %v428 = vld [vmem:[%s3] sm:$0xff]
      %v429 = vld [vmem:[%s3 + $0x8] sm:$0xff]
      %v430 = vld [vmem:[%s3 + $0x10] sm:$0xff]
      %v431 = vld [vmem:[%s3 + $0x18] sm:$0xff]
      %v432 = vld [vmem:[%s3 + $0x20] sm:$0xff]
      %v433 = vld [vmem:[%s3 + $0x28] sm:$0xff]
      %v434 = vld [vmem:[%s3 + $0x30] sm:$0xff]
      %v435 = vld [vmem:[%s3 + $0x38] sm:$0xff]
      %v436 = vld [vmem:[%s3 + $0x40] sm:$0xff]
      %v437 = vld [vmem:[%s3 + $0x48] sm:$0xff]
      %v438 = vld [vmem:[%s3 + $0x50] sm:$0xff]
      %v439 = vld [vmem:[%s3 + $0x58] sm:$0xff]
      %v440 = vld [vmem:[%s3 + $0x60] sm:$0xff]
      %v441 = vld [vmem:[%s3 + $0x68] sm:$0xff]
      %v442 = vld [vmem:[%s3 + $0x70] sm:$0xff]
      %v443 = vld [vmem:[%s3 + $0x78] sm:$0xff]
      %v444 = vld [vmem:[#allocation2] sm:$0xff]
      %vm445 = vcmask 64512
      %v447 = vsel %vm445, %v428, 0
      %v450 = vsel %vm445, %v429, 0
      %v453 = vsel %vm445, %v430, 0
      %v456 = vsel %vm445, %v431, 0
      %v459 = vsel %vm445, %v432, 0
      %v462 = vsel %vm445, %v433, 0
      %v465 = vsel %vm445, %v434, 0
      %v468 = vsel %vm445, %v435, 0
      %v471 = vsel %vm445, %v436, 0
      %v474 = vsel %vm445, %v437, 0
      %v477 = vsel %vm445, %v438, 0
      %v480 = vsel %vm445, %v439, 0
      %v483 = vsel %vm445, %v440, 0
      %v486 = vsel %vm445, %v441, 0
      %v489 = vsel %vm445, %v442, 0
      %v492 = vsel %vm445, %v443, 0
      %494 = vmatprep.subr.mxu0 0.0
      %495 = vmatpush1.msra.mxu0 %v444
      %496 = vmatprep.subr.mxu0 0.0
      %497 = vmatpush1.msra.mxu0 0.0
      %498 = vmatprep.subr.mxu0 0.0
      %499 = vmatpush1.msra.mxu0 0.0
      %500 = vmatprep.subr.mxu0 0.0
      %501 = vmatpush1.msra.mxu0 0.0
      %502 = vmatprep.subr.mxu0 0.0
      %503 = vmatpush1.msra.mxu0 0.0
      %504 = vmatprep.subr.mxu0 0.0
      %505 = vmatpush1.msra.mxu0 0.0
      %506 = vmatprep.subr.mxu0 0.0
      %507 = vmatpush1.msra.mxu0 0.0
      %508 = vmatprep.subr.mxu0 0.0
      %509 = vmatpush1.msra.mxu0 0.0
      %510 = vmatprep.subr.mxu0 0.0
      %511 = vmatpush1.msra.mxu0 0.0
      %512 = vmatprep.subr.mxu0 0.0
      %513 = vmatpush1.msra.mxu0 0.0
      %514 = vmatprep.subr.mxu0 0.0
      %515 = vmatpush1.msra.mxu0 0.0
      %516 = vmatprep.subr.mxu0 0.0
      %517 = vmatpush1.msra.mxu0 0.0
      %518 = vmatprep.subr.mxu0 0.0
      %519 = vmatpush1.msra.mxu0 0.0
      %520 = vmatprep.subr.mxu0 0.0
      %521 = vmatpush1.msra.mxu0 0.0
      %522 = vmatprep.subr.mxu0 0.0
      %523 = vmatpush1.msra.mxu0 0.0
      %524 = vmatprep.subr.mxu0 0.0
      %525 = vmatpush1.msra.mxu0 0.0
      %526 = vmatprep.subr.mxu0 0.0
      %527 = vmatpush1.msra.mxu0 0.0
      %528 = vmatprep.subr.mxu0 0.0
      %529 = vmatpush1.msra.mxu0 0.0
      %530 = vmatprep.subr.mxu0 0.0
      %531 = vmatpush1.msra.mxu0 0.0
      %532 = vmatprep.subr.mxu0 0.0
      %533 = vmatpush1.msra.mxu0 0.0
      %534 = vmatprep.subr.mxu0 0.0
      %535 = vmatpush1.msra.mxu0 0.0
      %536 = vmatprep.subr.mxu0 0.0
      %537 = vmatpush1.msra.mxu0 0.0
      %538 = vmatprep.subr.mxu0 0.0
      %539 = vmatpush1.msra.mxu0 0.0
      %540 = vmatprep.subr.mxu0 0.0
      %541 = vmatpush1.msra.mxu0 0.0
      %542 = vmatprep.subr.mxu0 0.0
      %543 = vmatpush1.msra.mxu0 0.0
      %544 = vmatprep.subr.mxu0 0.0
      %545 = vmatpush1.msra.mxu0 0.0
      %546 = vmatprep.subr.mxu0 0.0
      %547 = vmatpush1.msra.mxu0 0.0
      %548 = vmatprep.subr.mxu0 0.0
      %549 = vmatpush1.msra.mxu0 0.0
      %550 = vmatprep.subr.mxu0 0.0
      %551 = vmatpush1.msra.mxu0 0.0
      %552 = vmatprep.subr.mxu0 0.0
      %553 = vmatpush1.msra.mxu0 0.0
      %554 = vmatprep.subr.mxu0 0.0
      %555 = vmatpush1.msra.mxu0 0.0
      %556 = vmatprep.subr.mxu0 0.0
      %557 = vmatpush1.msra.mxu0 0.0
      %558 = vmatprep.mubr.f32.mxu0 0.0
      %559 = vmatmul.mubr.f32.gmra.mrb[0].mxu0 %v447
      %v560 = vpop.f32.mrb[0].mxu0
      %v561 = vadd.f32 0.0, %v560
      %v562 = vpop.f32.mrb[0].mxu0
      %563 = vmatprep.mubr.f32.mxu0 0.0
      %564 = vmatmul.mubr.f32.gmra.mrb[0].mxu0 %v450
      %v565 = vpop.f32.mrb[0].mxu0
      %v566 = vadd.f32 0.0, %v565
      %v567 = vpop.f32.mrb[0].mxu0
      %568 = vmatprep.mubr.f32.mxu0 0.0
      %569 = vmatmul.mubr.f32.gmra.mrb[0].mxu0 %v453
      %v570 = vpop.f32.mrb[0].mxu0
      %v571 = vadd.f32 0.0, %v570
      %v572 = vpop.f32.mrb[0].mxu0
      %573 = vmatprep.mubr.f32.mxu0 0.0
      %574 = vmatmul.mubr.f32.gmra.mrb[0].mxu0 %v456
      %v575 = vpop.f32.mrb[0].mxu0
      %v576 = vadd.f32 0.0, %v575
      %v577 = vpop.f32.mrb[0].mxu0
      %578 = vmatprep.mubr.f32.mxu0 0.0
      %579 = vmatmul.mubr.f32.gmra.mrb[0].mxu0 %v459
      %v580 = vpop.f32.mrb[0].mxu0
      %v581 = vadd.f32 0.0, %v580
      %v582 = vpop.f32.mrb[0].mxu0
      %583 = vmatprep.mubr.f32.mxu0 0.0
      %584 = vmatmul.mubr.f32.gmra.mrb[0].mxu0 %v462
      %v585 = vpop.f32.mrb[0].mxu0
      %v586 = vadd.f32 0.0, %v585
      %v587 = vpop.f32.mrb[0].mxu0
      %588 = vmatprep.mubr.f32.mxu0 0.0
      %589 = vmatmul.mubr.f32.gmra.mrb[0].mxu0 %v465
      %v590 = vpop.f32.mrb[0].mxu0
      %v591 = vadd.f32 0.0, %v590
      %v592 = vpop.f32.mrb[0].mxu0
      %593 = vmatprep.mubr.f32.mxu0 0.0
      %594 = vmatmul.mubr.f32.gmra.mrb[0].mxu0 %v468
      %v595 = vpop.f32.mrb[0].mxu0
      %v596 = vadd.f32 0.0, %v595
      %v597 = vpop.f32.mrb[0].mxu0
      %598 = vmatprep.mubr.f32.mxu0 0.0
      %599 = vmatmul.mubr.f32.gmra.mrb[0].mxu0 %v471
      %v600 = vpop.f32.mrb[0].mxu0
      %v601 = vadd.f32 0.0, %v600
      %v602 = vpop.f32.mrb[0].mxu0
      %603 = vmatprep.mubr.f32.mxu0 0.0
      %604 = vmatmul.mubr.f32.gmra.mrb[0].mxu0 %v474
      %v605 = vpop.f32.mrb[0].mxu0
      %v606 = vadd.f32 0.0, %v605
      %v607 = vpop.f32.mrb[0].mxu0
      %608 = vmatprep.mubr.f32.mxu0 0.0
      %609 = vmatmul.mubr.f32.gmra.mrb[0].mxu0 %v477
      %v610 = vpop.f32.mrb[0].mxu0
      %v611 = vadd.f32 0.0, %v610
      %v612 = vpop.f32.mrb[0].mxu0
      %613 = vmatprep.mubr.f32.mxu0 0.0
      %614 = vmatmul.mubr.f32.gmra.mrb[0].mxu0 %v480
      %v615 = vpop.f32.mrb[0].mxu0
      %v616 = vadd.f32 0.0, %v615
      %v617 = vpop.f32.mrb[0].mxu0
      %618 = vmatprep.mubr.f32.mxu0 0.0
      %619 = vmatmul.mubr.f32.gmra.mrb[0].mxu0 %v483
      %v620 = vpop.f32.mrb[0].mxu0
      %v621 = vadd.f32 0.0, %v620
      %v622 = vpop.f32.mrb[0].mxu0
      %623 = vmatprep.mubr.f32.mxu0 0.0
      %624 = vmatmul.mubr.f32.gmra.mrb[0].mxu0 %v486
      %v625 = vpop.f32.mrb[0].mxu0
      %v626 = vadd.f32 0.0, %v625
      %v627 = vpop.f32.mrb[0].mxu0
      %628 = vmatprep.mubr.f32.mxu0 0.0
      %629 = vmatmul.mubr.f32.gmra.mrb[0].mxu0 %v489
      %v630 = vpop.f32.mrb[0].mxu0
      %v631 = vadd.f32 0.0, %v630
      %v632 = vpop.f32.mrb[0].mxu0
      %633 = vmatprep.mubr.f32.mxu0 0.0
      %634 = vmatmul.mubr.f32.gmra.mrb[0].mxu0 %v492
      %v635 = vpop.f32.mrb[0].mxu0
      %v636 = vadd.f32 0.0, %v635
      %v637 = vpop.f32.mrb[0].mxu0
      %638 = vdwg.mxu0
      %v639 = vmax.f32 %v561, 0.0
      %v640 = vmax.f32 %v566, 0.0
      %v641 = vmax.f32 %v571, 0.0
      %v642 = vmax.f32 %v576, 0.0
      %v643 = vmax.f32 %v581, 0.0
      %v644 = vmax.f32 %v586, 0.0
      %v645 = vmax.f32 %v591, 0.0
      %v646 = vmax.f32 %v596, 0.0
      %v647 = vmax.f32 %v601, 0.0
      %v648 = vmax.f32 %v606, 0.0
      %v649 = vmax.f32 %v611, 0.0
      %v650 = vmax.f32 %v616, 0.0
      %v651 = vmax.f32 %v621, 0.0
      %v652 = vmax.f32 %v626, 0.0
      %v653 = vmax.f32 %v631, 0.0
      %v654 = vmax.f32 %v636, 0.0
      %v655 = vld [vmem:[%s4] sm:$0xff]
      %v656 = vld [vmem:[%s4 + $0x8] sm:$0xff]
      %v657 = vld [vmem:[%s4 + $0x10] sm:$0xff]
      %v658 = vld [vmem:[%s4 + $0x18] sm:$0xff]
      %v659 = vld [vmem:[%s4 + $0x20] sm:$0xff]
      %v660 = vld [vmem:[%s4 + $0x28] sm:$0xff]
      %v661 = vld [vmem:[%s4 + $0x30] sm:$0xff]
      %v662 = vld [vmem:[%s4 + $0x38] sm:$0xff]
      %v663 = vld [vmem:[%s5] sm:$0xff]
      %v664 = vld [vmem:[%s5 + $0x8] sm:$0xff]
      %v665 = vld [vmem:[%s5 + $0x10] sm:$0xff]
      %v666 = vld [vmem:[%s5 + $0x18] sm:$0xff]
      %v667 = vld [vmem:[%s5 + $0x20] sm:$0xff]
      %v668 = vld [vmem:[%s5 + $0x28] sm:$0xff]
      %v669 = vld [vmem:[%s5 + $0x30] sm:$0xff]
      %v670 = vld [vmem:[%s5 + $0x38] sm:$0xff]
      %672 = vset.pattern.permute.xlu0 0
      %673 = vperm.xlu0 %672, %v663
      %v674 = vpop.permute.xlu0 %673
      %677 = vset.pattern.permute.xlu0 0
      %678 = vperm.xlu0 %677, %v664
      %v679 = vpop.permute.xlu0 %678
      %682 = vset.pattern.permute.xlu0 0
      %683 = vperm.xlu0 %682, %v665
      %v684 = vpop.permute.xlu0 %683
      %687 = vset.pattern.permute.xlu0 0
      %688 = vperm.xlu0 %687, %v666
      %v689 = vpop.permute.xlu0 %688
      %692 = vset.pattern.permute.xlu0 0
      %693 = vperm.xlu0 %692, %v667
      %v694 = vpop.permute.xlu0 %693
      %697 = vset.pattern.permute.xlu0 0
      %698 = vperm.xlu0 %697, %v668
      %v699 = vpop.permute.xlu0 %698
      %702 = vset.pattern.permute.xlu0 0
      %703 = vperm.xlu0 %702, %v669
      %v704 = vpop.permute.xlu0 %703
      %707 = vset.pattern.permute.xlu0 0
      %708 = vperm.xlu0 %707, %v670
      %v709 = vpop.permute.xlu0 %708
      %711 = vmatprep.subr.mxu0 0.0
      %712 = vmatpush1.msra.mxu0 %v639
      %713 = vmatprep.subr.mxu0 0.0
      %714 = vmatpush1.msra.mxu0 %v640
      %715 = vmatprep.subr.mxu0 0.0
      %716 = vmatpush1.msra.mxu0 %v641
      %717 = vmatprep.subr.mxu0 0.0
      %718 = vmatpush1.msra.mxu0 %v642
      %719 = vmatprep.subr.mxu0 0.0
      %720 = vmatpush1.msra.mxu0 %v643
      %721 = vmatprep.subr.mxu0 0.0
      %722 = vmatpush1.msra.mxu0 %v644
      %723 = vmatprep.subr.mxu0 0.0
      %724 = vmatpush1.msra.mxu0 %v645
      %725 = vmatprep.subr.mxu0 0.0
      %726 = vmatpush1.msra.mxu0 %v646
      %727 = vmatprep.subr.mxu0 0.0
      %728 = vmatpush1.msra.mxu0 %v647
      %729 = vmatprep.subr.mxu0 0.0
      %730 = vmatpush1.msra.mxu0 %v648
      %731 = vmatprep.subr.mxu0 0.0
      %732 = vmatpush1.msra.mxu0 %v649
      %733 = vmatprep.subr.mxu0 0.0
      %734 = vmatpush1.msra.mxu0 %v650
      %735 = vmatprep.subr.mxu0 0.0
      %736 = vmatpush1.msra.mxu0 %v651
      %737 = vmatprep.subr.mxu0 0.0
      %738 = vmatpush1.msra.mxu0 %v652
      %739 = vmatprep.subr.mxu0 0.0
      %740 = vmatpush1.msra.mxu0 %v653
      %741 = vmatprep.subr.mxu0 0.0
      %742 = vmatpush1.msra.mxu0 %v654
      %743 = vmatprep.subr.mxu0 0.0
      %744 = vmatpush1.msra.mxu0 0.0
      %745 = vmatprep.subr.mxu0 0.0
      %746 = vmatpush1.msra.mxu0 0.0
      %747 = vmatprep.subr.mxu0 0.0
      %748 = vmatpush1.msra.mxu0 0.0
      %749 = vmatprep.subr.mxu0 0.0
      %750 = vmatpush1.msra.mxu0 0.0
      %751 = vmatprep.subr.mxu0 0.0
      %752 = vmatpush1.msra.mxu0 0.0
      %753 = vmatprep.subr.mxu0 0.0
      %754 = vmatpush1.msra.mxu0 0.0
      %755 = vmatprep.subr.mxu0 0.0
      %756 = vmatpush1.msra.mxu0 0.0
      %757 = vmatprep.subr.mxu0 0.0
      %758 = vmatpush1.msra.mxu0 0.0
      %759 = vmatprep.subr.mxu0 0.0
      %760 = vmatpush1.msra.mxu0 0.0
      %761 = vmatprep.subr.mxu0 0.0
      %762 = vmatpush1.msra.mxu0 0.0
      %763 = vmatprep.subr.mxu0 0.0
      %764 = vmatpush1.msra.mxu0 0.0
      %765 = vmatprep.subr.mxu0 0.0
      %766 = vmatpush1.msra.mxu0 0.0
      %767 = vmatprep.subr.mxu0 0.0
      %768 = vmatpush1.msra.mxu0 0.0
      %769 = vmatprep.subr.mxu0 0.0
      %770 = vmatpush1.msra.mxu0 0.0
      %771 = vmatprep.subr.mxu0 0.0
      %772 = vmatpush1.msra.mxu0 0.0
      %773 = vmatprep.subr.mxu0 0.0
      %774 = vmatpush1.msra.mxu0 0.0
      %775 = vmatprep.mubr.f32.mxu0 0.0
      %776 = vmatmul.mubr.f32.gmra.mrb[0].mxu0 %v655
      %v777 = vpop.f32.mrb[0].mxu0
      %v778 = vadd.f32 %v674, %v777
      %v779 = vpop.f32.mrb[0].mxu0
      %780 = vmatprep.mubr.f32.mxu0 0.0
      %781 = vmatmul.mubr.f32.gmra.mrb[0].mxu0 %v656
      %v782 = vpop.f32.mrb[0].mxu0
      %v783 = vadd.f32 %v679, %v782
      %v784 = vpop.f32.mrb[0].mxu0
      %785 = vmatprep.mubr.f32.mxu0 0.0
      %786 = vmatmul.mubr.f32.gmra.mrb[0].mxu0 %v657
      %v787 = vpop.f32.mrb[0].mxu0
      %v788 = vadd.f32 %v684, %v787
      %v789 = vpop.f32.mrb[0].mxu0
      %790 = vmatprep.mubr.f32.mxu0 0.0
      %791 = vmatmul.mubr.f32.gmra.mrb[0].mxu0 %v658
      %v792 = vpop.f32.mrb[0].mxu0
      %v793 = vadd.f32 %v689, %v792
      %v794 = vpop.f32.mrb[0].mxu0
      %795 = vmatprep.mubr.f32.mxu0 0.0
      %796 = vmatmul.mubr.f32.gmra.mrb[0].mxu0 %v659
      %v797 = vpop.f32.mrb[0].mxu0
      %v798 = vadd.f32 %v694, %v797
      %v799 = vpop.f32.mrb[0].mxu0
      %800 = vmatprep.mubr.f32.mxu0 0.0
      %801 = vmatmul.mubr.f32.gmra.mrb[0].mxu0 %v660
      %v802 = vpop.f32.mrb[0].mxu0
      %v803 = vadd.f32 %v699, %v802
      %v804 = vpop.f32.mrb[0].mxu0
      %805 = vmatprep.mubr.f32.mxu0 0.0
      %806 = vmatmul.mubr.f32.gmra.mrb[0].mxu0 %v661
      %v807 = vpop.f32.mrb[0].mxu0
      %v808 = vadd.f32 %v704, %v807
      %v809 = vpop.f32.mrb[0].mxu0
      %810 = vmatprep.mubr.f32.mxu0 0.0
      %811 = vmatmul.mubr.f32.gmra.mrb[0].mxu0 %v662
      %v812 = vpop.f32.mrb[0].mxu0
      %v813 = vadd.f32 %v709, %v812
      %v814 = vpop.f32.mrb[0].mxu0
      %815 = vdwg.mxu0
      %v816 = vmax.f32 %v778, 0.0
      %v817 = vmax.f32 %v783, 0.0
      %v818 = vmax.f32 %v788, 0.0
      %v819 = vmax.f32 %v793, 0.0
      %v820 = vmax.f32 %v798, 0.0
      %v821 = vmax.f32 %v803, 0.0
      %v822 = vmax.f32 %v808, 0.0
      %v823 = vmax.f32 %v813, 0.0
      %v824 = vld [vmem:[%s6] sm:$0xff]
      %v825 = vld [vmem:[%s6 + $0x8] sm:$0xff]
      %v826 = vld [vmem:[%s6 + $0x10] sm:$0xff]
      %v827 = vld [vmem:[%s6 + $0x18] sm:$0xff]
      %v828 = vld [vmem:[%s7] sm:$0xff]
      %v829 = vld [vmem:[%s7 + $0x8] sm:$0xff]
      %v830 = vld [vmem:[%s7 + $0x10] sm:$0xff]
      %v831 = vld [vmem:[%s7 + $0x18] sm:$0xff]
      %833 = vset.pattern.permute.xlu0 0
      %834 = vperm.xlu0 %833, %v828
      %v835 = vpop.permute.xlu0 %834
      %838 = vset.pattern.permute.xlu0 0
      %839 = vperm.xlu0 %838, %v829
      %v840 = vpop.permute.xlu0 %839
      %843 = vset.pattern.permute.xlu0 0
      %844 = vperm.xlu0 %843, %v830
      %v845 = vpop.permute.xlu0 %844
      %848 = vset.pattern.permute.xlu0 0
      %849 = vperm.xlu0 %848, %v831
      %v850 = vpop.permute.xlu0 %849
      %vm852 = vcmask 523264
      %v854 = vsel %vm852, %v824, 0
      %v857 = vsel %vm852, %v825, 0
      %v860 = vsel %vm852, %v826, 0
      %v863 = vsel %vm852, %v827, 0
      %865 = vmatprep.subr.mxu0 0.0
      %866 = vmatpush1.msra.mxu0 %v816
      %867 = vmatprep.subr.mxu0 0.0
      %868 = vmatpush1.msra.mxu0 %v817
      %869 = vmatprep.subr.mxu0 0.0
      %870 = vmatpush1.msra.mxu0 %v818
      %871 = vmatprep.subr.mxu0 0.0
      %872 = vmatpush1.msra.mxu0 %v819
      %873 = vmatprep.subr.mxu0 0.0
      %874 = vmatpush1.msra.mxu0 %v820
      %875 = vmatprep.subr.mxu0 0.0
      %876 = vmatpush1.msra.mxu0 %v821
      %877 = vmatprep.subr.mxu0 0.0
      %878 = vmatpush1.msra.mxu0 %v822
      %879 = vmatprep.subr.mxu0 0.0
      %880 = vmatpush1.msra.mxu0 %v823
      %881 = vmatprep.subr.mxu0 0.0
      %882 = vmatpush1.msra.mxu0 0.0
      %883 = vmatprep.subr.mxu0 0.0
      %884 = vmatpush1.msra.mxu0 0.0
      %885 = vmatprep.subr.mxu0 0.0
      %886 = vmatpush1.msra.mxu0 0.0
      %887 = vmatprep.subr.mxu0 0.0
      %888 = vmatpush1.msra.mxu0 0.0
      %889 = vmatprep.subr.mxu0 0.0
      %890 = vmatpush1.msra.mxu0 0.0
      %891 = vmatprep.subr.mxu0 0.0
      %892 = vmatpush1.msra.mxu0 0.0
      %893 = vmatprep.subr.mxu0 0.0
      %894 = vmatpush1.msra.mxu0 0.0
      %895 = vmatprep.subr.mxu0 0.0
      %896 = vmatpush1.msra.mxu0 0.0
      %897 = vmatprep.subr.mxu0 0.0
      %898 = vmatpush1.msra.mxu0 0.0
      %899 = vmatprep.subr.mxu0 0.0
      %900 = vmatpush1.msra.mxu0 0.0
      %901 = vmatprep.subr.mxu0 0.0
      %902 = vmatpush1.msra.mxu0 0.0
      %903 = vmatprep.subr.mxu0 0.0
      %904 = vmatpush1.msra.mxu0 0.0
      %905 = vmatprep.subr.mxu0 0.0
      %906 = vmatpush1.msra.mxu0 0.0
      %907 = vmatprep.subr.mxu0 0.0
      %908 = vmatpush1.msra.mxu0 0.0
      %909 = vmatprep.subr.mxu0 0.0
      %910 = vmatpush1.msra.mxu0 0.0
      %911 = vmatprep.subr.mxu0 0.0
      %912 = vmatpush1.msra.mxu0 0.0
      %913 = vmatprep.subr.mxu0 0.0
      %914 = vmatpush1.msra.mxu0 0.0
      %915 = vmatprep.subr.mxu0 0.0
      %916 = vmatpush1.msra.mxu0 0.0
      %917 = vmatprep.subr.mxu0 0.0
      %918 = vmatpush1.msra.mxu0 0.0
      %919 = vmatprep.subr.mxu0 0.0
      %920 = vmatpush1.msra.mxu0 0.0
      %921 = vmatprep.subr.mxu0 0.0
      %922 = vmatpush1.msra.mxu0 0.0
      %923 = vmatprep.subr.mxu0 0.0
      %924 = vmatpush1.msra.mxu0 0.0
      %925 = vmatprep.subr.mxu0 0.0
      %926 = vmatpush1.msra.mxu0 0.0
      %927 = vmatprep.subr.mxu0 0.0
      %928 = vmatpush1.msra.mxu0 0.0
      %929 = vmatprep.mubr.f32.mxu0 0.0
      %930 = vmatmul.mubr.f32.gmra.mrb[0].mxu0 %v854
      %v931 = vpop.f32.mrb[0].mxu0
      %v932 = vadd.f32 %v835, %v931
      %v933 = vpop.f32.mrb[0].mxu0
      %934 = vmatprep.mubr.f32.mxu0 0.0
      %935 = vmatmul.mubr.f32.gmra.mrb[0].mxu0 %v857
      %v936 = vpop.f32.mrb[0].mxu0
      %v937 = vadd.f32 %v840, %v936
      %v938 = vpop.f32.mrb[0].mxu0
      %939 = vmatprep.mubr.f32.mxu0 0.0
      %940 = vmatmul.mubr.f32.gmra.mrb[0].mxu0 %v860
      %v941 = vpop.f32.mrb[0].mxu0
      %v942 = vadd.f32 %v845, %v941
      %v943 = vpop.f32.mrb[0].mxu0
      %944 = vmatprep.mubr.f32.mxu0 0.0
      %945 = vmatmul.mubr.f32.gmra.mrb[0].mxu0 %v863
      %v946 = vpop.f32.mrb[0].mxu0
      %v947 = vadd.f32 %v850, %v946
      %v948 = vpop.f32.mrb[0].mxu0
      %949 = vdwg.mxu0
      %v950 = vmax.f32 %v932, 0.0
      %v951 = vmax.f32 %v937, 0.0
      %v952 = vmax.f32 %v942, 0.0
      %v953 = vmax.f32 %v947, 0.0
      %v954 = vld [vmem:[%s8] sm:$0x3]
      %v955 = vld [vmem:[%s9] sm:$0x3]
      %957 = vset.pattern.permute.xlu0 0
      %958 = vperm.xlu0 %957, %v955
      %v959 = vpop.permute.xlu0 %958
      %vm961 = vcmask 261120
      %v963 = vsel %vm961, %v954, 0
      %965 = vmatprep.subr.mxu0 0.0
      %966 = vmatpush1.msra.mxu0 %v950
      %967 = vmatprep.subr.mxu0 0.0
      %968 = vmatpush1.msra.mxu0 %v951
      %969 = vmatprep.subr.mxu0 0.0
      %970 = vmatpush1.msra.mxu0 %v952
      %971 = vmatprep.subr.mxu0 0.0
      %972 = vmatpush1.msra.mxu0 %v953
      %973 = vmatprep.subr.mxu0 0.0
      %974 = vmatpush1.msra.mxu0 0.0
      %975 = vmatprep.subr.mxu0 0.0
      %976 = vmatpush1.msra.mxu0 0.0
      %977 = vmatprep.subr.mxu0 0.0
      %978 = vmatpush1.msra.mxu0 0.0
      %979 = vmatprep.subr.mxu0 0.0
      %980 = vmatpush1.msra.mxu0 0.0
      %981 = vmatprep.subr.mxu0 0.0
      %982 = vmatpush1.msra.mxu0 0.0
      %983 = vmatprep.subr.mxu0 0.0
      %984 = vmatpush1.msra.mxu0 0.0
      %985 = vmatprep.subr.mxu0 0.0
      %986 = vmatpush1.msra.mxu0 0.0
      %987 = vmatprep.subr.mxu0 0.0
      %988 = vmatpush1.msra.mxu0 0.0
      %989 = vmatprep.subr.mxu0 0.0
      %990 = vmatpush1.msra.mxu0 0.0
      %991 = vmatprep.subr.mxu0 0.0
      %992 = vmatpush1.msra.mxu0 0.0
      %993 = vmatprep.subr.mxu0 0.0
      %994 = vmatpush1.msra.mxu0 0.0
      %995 = vmatprep.subr.mxu0 0.0
      %996 = vmatpush1.msra.mxu0 0.0
      %997 = vmatprep.subr.mxu0 0.0
      %998 = vmatpush1.msra.mxu0 0.0
      %999 = vmatprep.subr.mxu0 0.0
      %1000 = vmatpush1.msra.mxu0 0.0
      %1001 = vmatprep.subr.mxu0 0.0
      %1002 = vmatpush1.msra.mxu0 0.0
      %1003 = vmatprep.subr.mxu0 0.0
      %1004 = vmatpush1.msra.mxu0 0.0
      %1005 = vmatprep.subr.mxu0 0.0
      %1006 = vmatpush1.msra.mxu0 0.0
      %1007 = vmatprep.subr.mxu0 0.0
      %1008 = vmatpush1.msra.mxu0 0.0
      %1009 = vmatprep.subr.mxu0 0.0
      %1010 = vmatpush1.msra.mxu0 0.0
      %1011 = vmatprep.subr.mxu0 0.0
      %1012 = vmatpush1.msra.mxu0 0.0
      %1013 = vmatprep.subr.mxu0 0.0
      %1014 = vmatpush1.msra.mxu0 0.0
      %1015 = vmatprep.subr.mxu0 0.0
      %1016 = vmatpush1.msra.mxu0 0.0
      %1017 = vmatprep.subr.mxu0 0.0
      %1018 = vmatpush1.msra.mxu0 0.0
      %1019 = vmatprep.subr.mxu0 0.0
      %1020 = vmatpush1.msra.mxu0 0.0
      %1021 = vmatprep.subr.mxu0 0.0
      %1022 = vmatpush1.msra.mxu0 0.0
      %1023 = vmatprep.subr.mxu0 0.0
      %1024 = vmatpush1.msra.mxu0 0.0
      %1025 = vmatprep.subr.mxu0 0.0
      %1026 = vmatpush1.msra.mxu0 0.0
      %1027 = vmatprep.subr.mxu0 0.0
      %1028 = vmatpush1.msra.mxu0 0.0
      %1029 = vmatprep.mubr.f32.mxu0 0.0
      %1030 = vmatmul.mubr.f32.gmra.mrb[0].mxu0 %v963
      %v1031 = vpop.f32.mrb[0].mxu0
      %v1032 = vadd.f32 %v959, %v1031
      %v1033 = vpop.f32.mrb[0].mxu0
      %1034 = vdwg.mxu0
      %1035 = vst [vmem:[%s416] sm:$0x1] %v1032
      %v1036 = vmul.f32 %v1032, 1.442695
      %v1037 = vpow.pop %v1036
      %v1038 = vadd.f32 %v1037, 1e-08
      %1039 = vst [vmem:[%s419 - $0x1] sm:$0x2] %v1038
      %p1040 = scmp.lt.s32.totalorder %s23, 2
      %s1041 = scalar_select %p1040, %s23, 2
      %s1042 = scalar_lea.vmem %s10, %s1041
      %p1043 = scmp.lt.s32.totalorder %s23, 2
      %s1044 = scalar_select %p1043, %s23, 2
      %s1045 = scalar_lea.vmem %s11, %s1044
      // Predicated region
      $region61: #{encoder_forward.1} parent=59 // pred_check
        %p1046 = pneg %p266
      $region62: #{encoder_forward.1} parent=59 // pred_check_branch
        %1048 = sbr.rel (%p1046) target = $region64
      $region63: #{encoder_forward.1} parent=59 // pred_region
        _
      $region64: #{encoder_forward.1} parent=59 // pred_fallthru
        _
      // Predicated region
      $region65: #{encoder_forward.1} parent=59 // pred_check
        %p1049 = pneg %p292
      $region66: #{encoder_forward.1} parent=59 // pred_check_branch
        %1051 = sbr.rel (%p1049) target = $region68
      $region67: #{encoder_forward.1} parent=59 // pred_region
        _
      $region68: #{encoder_forward.1} parent=59 // pred_fallthru
        _
    $region60: #{encoder_forward.1} parent=5 // pred_fallthru
      _
    %p1052 = scmp.le.s32.totalorder 2, %s18
    // Predicated region
    $region69: #{encoder_forward.1} parent=5 // pred_check
      %p1053 = pneg %p1052
    $region70: #{encoder_forward.1} parent=5 // pred_check_branch
      %1055 = sbr.rel (%p1053) target = $region72
    $region71: #{encoder_forward.1} parent=5 // pred_region
      %s1056 = ssub.s32 %s18, 2
      // Predicated region
      $region73: #{encoder_forward.1} parent=71 // pred_check
        %p1057 = pneg %p272
      $region74: #{encoder_forward.1} parent=71 // pred_check_branch
        %1059 = sbr.rel (%p1057) target = $region76
      $region75: #{encoder_forward.1} parent=71 // pred_region
        %p1060 = scmp.lt.s32.totalorder %s24, 2
        %s1061 = scalar_select %p1060, %s24, 2
        %s1062 = scalar_lea.vmem %s10, %s1061
      $region76: #{encoder_forward.1} parent=71 // pred_fallthru
        _
      // Predicated region
      $region77: #{encoder_forward.1} parent=71 // pred_check
        %p1063 = pneg %p298
      $region78: #{encoder_forward.1} parent=71 // pred_check_branch
        %1065 = sbr.rel (%p1063) target = $region80
      $region79: #{encoder_forward.1} parent=71 // pred_region
        %p1066 = scmp.lt.s32.totalorder %s24, 2
        %s1067 = scalar_select %p1066, %s24, 2
        %s1068 = scalar_lea.vmem %s11, %s1067
      $region80: #{encoder_forward.1} parent=71 // pred_fallthru
        _
    $region72: #{encoder_forward.1} parent=5 // pred_fallthru
      _
  $region6: #{encoder_forward.1} parent=0 // loop_footer
    %s22 = sadd.s32 1, %s18
  $region7: #{encoder_forward.1} parent=0 // loop_footer_branch
    %17 = sbr.rel target = $region3
  $region8: #{encoder_forward.1} parent=0 // loop_exit
    _

</llo_original>
